<compile_context>
chip_gen: v7x
topology: tpu7x:2x2x1
jax: 0.10.0
libtpu: 0.0.40
codegen_flags: <defaults>
</compile_context>

<pallas_src>
import jax
import jax.numpy as jnp
from jax.experimental import pallas as pl
from jax.experimental.pallas import tpu as pltpu

_LANE = 128


def _lcl_sigmoid_kernel(x_ref, w_ref, o_ref):
    # x_ref: (N,    Cin, Pc)  -- lane-dense flattened spatial chunk
    # w_ref: (Cout, Cin, Pc)  -- per-pixel weights for the same spatial chunk
    # o_ref: (N,    Cout, Pc)
    n_batch = x_ref.shape[0]
    cout = w_ref.shape[0]
    cin = w_ref.shape[1]
    for n in range(n_batch):
        for o in range(cout):
            # Fused multiply-accumulate over Cin: only one f32 accumulator slab live.
            acc = x_ref[n, 0].astype(jnp.float32) * w_ref[o, 0].astype(jnp.float32)
            for c in range(1, cin):
                acc = acc + x_ref[n, c].astype(jnp.float32) * w_ref[o, c].astype(jnp.float32)
            # Exact sigmoid: exp goes to the EUP slot; keep numerical parity with the
            # reference (see review caveat on approx reciprocal).
            o_ref[n, o] = jax.nn.sigmoid(acc).astype(o_ref.dtype)


def _default_spatial_splits():
    # v7x exposes 2 TensorCores per Pallas device -> split spatially so both run and
    # each core only DMAs its own half of the per-pixel weights.  v5e/v6e have a
    # single TC, where a multi-step grid is pure per-step overhead (~0.35 us/step).
    try:
        kind = jax.devices()[0].device_kind.lower()
    except Exception:
        return 1
    return 2 if "v7" in kind else 1


def out_conv_lcl(x, weight, spatial_splits=None):
    """x: (N, Cin, H, W), weight: (Cout, Cin, H, W) -> sigmoid(per-pixel channel mix), (N, Cout, H, W).

    `weight` may be bf16 (fewer HBM bytes); the kernel upcasts to f32 internally.
    """
    N, Cin, H, W = x.shape
    Cout, Cin_w, Hw, Ww = weight.shape
    assert (Cin, H, W) == (Cin_w, Hw, Ww)

    P = H * W
    # Free reshapes (collapse contiguous trailing dims) -- no padding, no extra HBM
    # traffic; full-extent BlockSpec dims below handle the masked lane tail in-kernel.
    xf = x.reshape(N, Cin, P)
    wf = weight.reshape(Cout, Cin, P)

    splits = spatial_splits if spatial_splits is not None else _default_spatial_splits()
    if splits > 1 and (P % (splits * _LANE) != 0):
        splits = 1  # can't split into lane-aligned chunks; fall back to one resident block
    Pc = P // splits

    x_item = jnp.dtype(x.dtype).itemsize
    w_item = jnp.dtype(weight.dtype).itemsize
    cost = pl.CostEstimate(
        flops=2 * N * Cout * Cin * P,
        transcendentals=N * Cout * P,
        bytes_accessed=x.size * x_item + weight.size * w_item + N * Cout * P * x_item,
    )

    out = pl.pallas_call(
        _lcl_sigmoid_kernel,
        out_shape=jax.ShapeDtypeStruct((N, Cout, P), x.dtype),
        grid_spec=pltpu.PrefetchScalarGridSpec(
            num_scalar_prefetch=0,
            # splits == 1 on single-TC chips (one grid step, one DMA per array);
            # splits == 2 on v7x (spatial halves shard across the two TensorCores).
            grid=(splits,),
            in_specs=[
                # Full batch + channels, one spatial chunk.  Last-two dims are either
                # full array extents or 128-multiples, so no wrapper padding is needed.
                pl.BlockSpec((N, Cin, Pc), lambda s: (0, 0, s)),
                # Per-pixel weights for the same spatial chunk: per-core weight traffic
                # is proportional to per-core work (matters as Cout*Cin*H*W grows on
                # v7x's smaller 64 MiB VMEM).
                pl.BlockSpec((Cout, Cin, Pc), lambda s: (0, 0, s)),
            ],
            out_specs=pl.BlockSpec((N, Cout, Pc), lambda s: (0, 0, s)),
        ),
        compiler_params=pltpu.CompilerParams(
            dimension_semantics=("parallel",),
        ),
        cost_estimate=cost,
    )(xf, wf)

    return out.reshape(N, Cout, H, W)  # free reshape (split trailing dim), no slice


def reference(x, weight):
    # pure-JAX reference of the per-pixel locally-connected 1x1 conv + sigmoid
    return jax.nn.sigmoid(jnp.einsum("nchw,ochw->nohw", x, weight))


if __name__ == "__main__":
    key = jax.random.PRNGKey(0)
    kx, kw, kx2, kw2 = jax.random.split(key, 4)

    # Small shapes consistent with the output head (batch=2).
    N, Cin, Cout, H, W = 2, 4, 2, 16, 16
    x = jax.random.normal(kx, (N, Cin, H, W), dtype=jnp.float32)
    w = jax.random.normal(kw, (Cout, Cin, H, W), dtype=jnp.float32)

    out = jax.block_until_ready(out_conv_lcl(x, w))
    ref = reference(x, w)
    assert out.shape == (N, Cout, H, W)
    assert jnp.allclose(out, ref, atol=1e-5, rtol=1e-5)

    # Non-128-multiple spatial extent (stand-in for the model's 100x180 head): no
    # wrapper pad/slice -- full-extent BlockSpecs + in-kernel masked lane tail.
    H2, W2 = 10, 18
    x2 = jax.random.normal(kx2, (N, Cin, H2, W2), dtype=jnp.float32)
    w2 = jax.random.normal(kw2, (Cout, Cin, H2, W2), dtype=jnp.float32)
    out2 = jax.block_until_ready(out_conv_lcl(x2, w2))
    assert jnp.allclose(out2, reference(x2, w2), atol=1e-5, rtol=1e-5)

    # bf16 weights (review: cuts weight HBM bytes in half); kernel upcasts in place.
    out_bf16 = jax.block_until_ready(out_conv_lcl(x, w.astype(jnp.bfloat16)))
    assert jnp.allclose(out_bf16, ref, atol=5e-2)

    print("KERNEL_OK")
</pallas_src>

<mosaic_0001>
module attributes {stable_mosaic.version = 11 : i64} {
  func.func @_lcl_sigmoid_kernel(%arg0: i32, %arg1: memref<2x4x256xf32, #tpu.memory_space<vmem>>, %arg2: memref<2x4x256xf32, #tpu.memory_space<vmem>>, %arg3: memref<2x2x256xf32, #tpu.memory_space<vmem>>) attributes {dimension_semantics = [#tpu.dimension_semantics<parallel>], iteration_bounds = array<i64: 1>, scalar_prefetch = 0 : i64, scratch_operands = 0 : i64, tpu.core_type = #tpu.core_type<tc>, window_params = [{transform_indices = @transform_0, window_bounds = array<i64: 2, 4, 256>}, {transform_indices = @transform_1, window_bounds = array<i64: 2, 4, 256>}, {transform_indices = @transform_2, window_bounds = array<i64: 2, 2, 256>}]} {
    %c0 = arith.constant 0 : index
    %c0_0 = arith.constant 0 : index
    %c0_1 = arith.constant 0 : index
    %0 = vector.load %arg1[%c0, %c0_0, %c0_1] : memref<2x4x256xf32, #tpu.memory_space<vmem>>, vector<1x1x256xf32>
    %1 = vector.shape_cast %0 : vector<1x1x256xf32> to vector<256xf32>
    %c0_2 = arith.constant 0 : index
    %c0_3 = arith.constant 0 : index
    %c0_4 = arith.constant 0 : index
    %2 = vector.load %arg2[%c0_2, %c0_3, %c0_4] : memref<2x4x256xf32, #tpu.memory_space<vmem>>, vector<1x1x256xf32>
    %3 = vector.shape_cast %2 : vector<1x1x256xf32> to vector<256xf32>
    %4 = arith.mulf %1, %3 : vector<256xf32>
    %c0_5 = arith.constant 0 : index
    %c1 = arith.constant 1 : index
    %c0_6 = arith.constant 0 : index
    %5 = vector.load %arg1[%c0_5, %c1, %c0_6] : memref<2x4x256xf32, #tpu.memory_space<vmem>>, vector<1x1x256xf32>
    %6 = vector.shape_cast %5 : vector<1x1x256xf32> to vector<256xf32>
    %c0_7 = arith.constant 0 : index
    %c1_8 = arith.constant 1 : index
    %c0_9 = arith.constant 0 : index
    %7 = vector.load %arg2[%c0_7, %c1_8, %c0_9] : memref<2x4x256xf32, #tpu.memory_space<vmem>>, vector<1x1x256xf32>
    %8 = vector.shape_cast %7 : vector<1x1x256xf32> to vector<256xf32>
    %9 = arith.mulf %6, %8 : vector<256xf32>
    %10 = arith.addf %4, %9 : vector<256xf32>
    %c0_10 = arith.constant 0 : index
    %c2 = arith.constant 2 : index
    %c0_11 = arith.constant 0 : index
    %11 = vector.load %arg1[%c0_10, %c2, %c0_11] : memref<2x4x256xf32, #tpu.memory_space<vmem>>, vector<1x1x256xf32>
    %12 = vector.shape_cast %11 : vector<1x1x256xf32> to vector<256xf32>
    %c0_12 = arith.constant 0 : index
    %c2_13 = arith.constant 2 : index
    %c0_14 = arith.constant 0 : index
    %13 = vector.load %arg2[%c0_12, %c2_13, %c0_14] : memref<2x4x256xf32, #tpu.memory_space<vmem>>, vector<1x1x256xf32>
    %14 = vector.shape_cast %13 : vector<1x1x256xf32> to vector<256xf32>
    %15 = arith.mulf %12, %14 : vector<256xf32>
    %16 = arith.addf %10, %15 : vector<256xf32>
    %c0_15 = arith.constant 0 : index
    %c3 = arith.constant 3 : index
    %c0_16 = arith.constant 0 : index
    %17 = vector.load %arg1[%c0_15, %c3, %c0_16] : memref<2x4x256xf32, #tpu.memory_space<vmem>>, vector<1x1x256xf32>
    %18 = vector.shape_cast %17 : vector<1x1x256xf32> to vector<256xf32>
    %c0_17 = arith.constant 0 : index
    %c3_18 = arith.constant 3 : index
    %c0_19 = arith.constant 0 : index
    %19 = vector.load %arg2[%c0_17, %c3_18, %c0_19] : memref<2x4x256xf32, #tpu.memory_space<vmem>>, vector<1x1x256xf32>
    %20 = vector.shape_cast %19 : vector<1x1x256xf32> to vector<256xf32>
    %21 = arith.mulf %18, %20 : vector<256xf32>
    %22 = arith.addf %16, %21 : vector<256xf32>
    %23 = arith.negf %22 : vector<256xf32>
    %24 = math.exp %23 : vector<256xf32>
    %cst = arith.constant 1.000000e+00 : f32
    %25 = vector.broadcast %cst : f32 to vector<256xf32>
    %26 = arith.addf %25, %24 : vector<256xf32>
    %27 = arith.divf %25, %26 : vector<256xf32>
    %c0_20 = arith.constant 0 : index
    %c0_21 = arith.constant 0 : index
    %c0_22 = arith.constant 0 : index
    %28 = vector.load %arg3[%c0_20, %c0_21, %c0_22] : memref<2x2x256xf32, #tpu.memory_space<vmem>>, vector<1x1x256xf32>
    %29 = vector.shape_cast %28 : vector<1x1x256xf32> to vector<256xf32>
    %30 = vector.shape_cast %27 : vector<256xf32> to vector<1x1x256xf32>
    tpu.vector_store %arg3[%c0_20, %c0_21, %c0_22], %30 {strides = array<i32>} : memref<2x2x256xf32, #tpu.memory_space<vmem>>, vector<1x1x256xf32>,
    %c0_23 = arith.constant 0 : index
    %c0_24 = arith.constant 0 : index
    %c0_25 = arith.constant 0 : index
    %31 = vector.load %arg1[%c0_23, %c0_24, %c0_25] : memref<2x4x256xf32, #tpu.memory_space<vmem>>, vector<1x1x256xf32>
    %32 = vector.shape_cast %31 : vector<1x1x256xf32> to vector<256xf32>
    %c1_26 = arith.constant 1 : index
    %c0_27 = arith.constant 0 : index
    %c0_28 = arith.constant 0 : index
    %33 = vector.load %arg2[%c1_26, %c0_27, %c0_28] : memref<2x4x256xf32, #tpu.memory_space<vmem>>, vector<1x1x256xf32>
    %34 = vector.shape_cast %33 : vector<1x1x256xf32> to vector<256xf32>
    %35 = arith.mulf %32, %34 : vector<256xf32>
    %c0_29 = arith.constant 0 : index
    %c1_30 = arith.constant 1 : index
    %c0_31 = arith.constant 0 : index
    %36 = vector.load %arg1[%c0_29, %c1_30, %c0_31] : memref<2x4x256xf32, #tpu.memory_space<vmem>>, vector<1x1x256xf32>
    %37 = vector.shape_cast %36 : vector<1x1x256xf32> to vector<256xf32>
    %c1_32 = arith.constant 1 : index
    %c1_33 = arith.constant 1 : index
    %c0_34 = arith.constant 0 : index
    %38 = vector.load %arg2[%c1_32, %c1_33, %c0_34] : memref<2x4x256xf32, #tpu.memory_space<vmem>>, vector<1x1x256xf32>
    %39 = vector.shape_cast %38 : vector<1x1x256xf32> to vector<256xf32>
    %40 = arith.mulf %37, %39 : vector<256xf32>
    %41 = arith.addf %35, %40 : vector<256xf32>
    %c0_35 = arith.constant 0 : index
    %c2_36 = arith.constant 2 : index
    %c0_37 = arith.constant 0 : index
    %42 = vector.load %arg1[%c0_35, %c2_36, %c0_37] : memref<2x4x256xf32, #tpu.memory_space<vmem>>, vector<1x1x256xf32>
    %43 = vector.shape_cast %42 : vector<1x1x256xf32> to vector<256xf32>
    %c1_38 = arith.constant 1 : index
    %c2_39 = arith.constant 2 : index
    %c0_40 = arith.constant 0 : index
    %44 = vector.load %arg2[%c1_38, %c2_39, %c0_40] : memref<2x4x256xf32, #tpu.memory_space<vmem>>, vector<1x1x256xf32>
    %45 = vector.shape_cast %44 : vector<1x1x256xf32> to vector<256xf32>
    %46 = arith.mulf %43, %45 : vector<256xf32>
    %47 = arith.addf %41, %46 : vector<256xf32>
    %c0_41 = arith.constant 0 : index
    %c3_42 = arith.constant 3 : index
    %c0_43 = arith.constant 0 : index
    %48 = vector.load %arg1[%c0_41, %c3_42, %c0_43] : memref<2x4x256xf32, #tpu.memory_space<vmem>>, vector<1x1x256xf32>
    %49 = vector.shape_cast %48 : vector<1x1x256xf32> to vector<256xf32>
    %c1_44 = arith.constant 1 : index
    %c3_45 = arith.constant 3 : index
    %c0_46 = arith.constant 0 : index
    %50 = vector.load %arg2[%c1_44, %c3_45, %c0_46] : memref<2x4x256xf32, #tpu.memory_space<vmem>>, vector<1x1x256xf32>
    %51 = vector.shape_cast %50 : vector<1x1x256xf32> to vector<256xf32>
    %52 = arith.mulf %49, %51 : vector<256xf32>
    %53 = arith.addf %47, %52 : vector<256xf32>
    %54 = arith.negf %53 : vector<256xf32>
    %55 = math.exp %54 : vector<256xf32>
    %cst_47 = arith.constant 1.000000e+00 : f32
    %56 = vector.broadcast %cst_47 : f32 to vector<256xf32>
    %57 = arith.addf %56, %55 : vector<256xf32>
    %58 = arith.divf %56, %57 : vector<256xf32>
    %c0_48 = arith.constant 0 : index
    %c1_49 = arith.constant 1 : index
    %c0_50 = arith.constant 0 : index
    %59 = vector.load %arg3[%c0_48, %c1_49, %c0_50] : memref<2x2x256xf32, #tpu.memory_space<vmem>>, vector<1x1x256xf32>
    %60 = vector.shape_cast %59 : vector<1x1x256xf32> to vector<256xf32>
    %61 = vector.shape_cast %58 : vector<256xf32> to vector<1x1x256xf32>
    tpu.vector_store %arg3[%c0_48, %c1_49, %c0_50], %61 {strides = array<i32>} : memref<2x2x256xf32, #tpu.memory_space<vmem>>, vector<1x1x256xf32>,
    %c1_51 = arith.constant 1 : index
    %c0_52 = arith.constant 0 : index
    %c0_53 = arith.constant 0 : index
    %62 = vector.load %arg1[%c1_51, %c0_52, %c0_53] : memref<2x4x256xf32, #tpu.memory_space<vmem>>, vector<1x1x256xf32>
    %63 = vector.shape_cast %62 : vector<1x1x256xf32> to vector<256xf32>
    %c0_54 = arith.constant 0 : index
    %c0_55 = arith.constant 0 : index
    %c0_56 = arith.constant 0 : index
    %64 = vector.load %arg2[%c0_54, %c0_55, %c0_56] : memref<2x4x256xf32, #tpu.memory_space<vmem>>, vector<1x1x256xf32>
    %65 = vector.shape_cast %64 : vector<1x1x256xf32> to vector<256xf32>
    %66 = arith.mulf %63, %65 : vector<256xf32>
    %c1_57 = arith.constant 1 : index
    %c1_58 = arith.constant 1 : index
    %c0_59 = arith.constant 0 : index
    %67 = vector.load %arg1[%c1_57, %c1_58, %c0_59] : memref<2x4x256xf32, #tpu.memory_space<vmem>>, vector<1x1x256xf32>
    %68 = vector.shape_cast %67 : vector<1x1x256xf32> to vector<256xf32>
    %c0_60 = arith.constant 0 : index
    %c1_61 = arith.constant 1 : index
    %c0_62 = arith.constant 0 : index
    %69 = vector.load %arg2[%c0_60, %c1_61, %c0_62] : memref<2x4x256xf32, #tpu.memory_space<vmem>>, vector<1x1x256xf32>
    %70 = vector.shape_cast %69 : vector<1x1x256xf32> to vector<256xf32>
    %71 = arith.mulf %68, %70 : vector<256xf32>
    %72 = arith.addf %66, %71 : vector<256xf32>
    %c1_63 = arith.constant 1 : index
    %c2_64 = arith.constant 2 : index
    %c0_65 = arith.constant 0 : index
    %73 = vector.load %arg1[%c1_63, %c2_64, %c0_65] : memref<2x4x256xf32, #tpu.memory_space<vmem>>, vector<1x1x256xf32>
    %74 = vector.shape_cast %73 : vector<1x1x256xf32> to vector<256xf32>
    %c0_66 = arith.constant 0 : index
    %c2_67 = arith.constant 2 : index
    %c0_68 = arith.constant 0 : index
    %75 = vector.load %arg2[%c0_66, %c2_67, %c0_68] : memref<2x4x256xf32, #tpu.memory_space<vmem>>, vector<1x1x256xf32>
    %76 = vector.shape_cast %75 : vector<1x1x256xf32> to vector<256xf32>
    %77 = arith.mulf %74, %76 : vector<256xf32>
    %78 = arith.addf %72, %77 : vector<256xf32>
    %c1_69 = arith.constant 1 : index
    %c3_70 = arith.constant 3 : index
    %c0_71 = arith.constant 0 : index
    %79 = vector.load %arg1[%c1_69, %c3_70, %c0_71] : memref<2x4x256xf32, #tpu.memory_space<vmem>>, vector<1x1x256xf32>
    %80 = vector.shape_cast %79 : vector<1x1x256xf32> to vector<256xf32>
    %c0_72 = arith.constant 0 : index
    %c3_73 = arith.constant 3 : index
    %c0_74 = arith.constant 0 : index
    %81 = vector.load %arg2[%c0_72, %c3_73, %c0_74] : memref<2x4x256xf32, #tpu.memory_space<vmem>>, vector<1x1x256xf32>
    %82 = vector.shape_cast %81 : vector<1x1x256xf32> to vector<256xf32>
    %83 = arith.mulf %80, %82 : vector<256xf32>
    %84 = arith.addf %78, %83 : vector<256xf32>
    %85 = arith.negf %84 : vector<256xf32>
    %86 = math.exp %85 : vector<256xf32>
    %cst_75 = arith.constant 1.000000e+00 : f32
    %87 = vector.broadcast %cst_75 : f32 to vector<256xf32>
    %88 = arith.addf %87, %86 : vector<256xf32>
    %89 = arith.divf %87, %88 : vector<256xf32>
    %c1_76 = arith.constant 1 : index
    %c0_77 = arith.constant 0 : index
    %c0_78 = arith.constant 0 : index
    %90 = vector.load %arg3[%c1_76, %c0_77, %c0_78] : memref<2x2x256xf32, #tpu.memory_space<vmem>>, vector<1x1x256xf32>
    %91 = vector.shape_cast %90 : vector<1x1x256xf32> to vector<256xf32>
    %92 = vector.shape_cast %89 : vector<256xf32> to vector<1x1x256xf32>
    tpu.vector_store %arg3[%c1_76, %c0_77, %c0_78], %92 {strides = array<i32>} : memref<2x2x256xf32, #tpu.memory_space<vmem>>, vector<1x1x256xf32>,
    %c1_79 = arith.constant 1 : index
    %c0_80 = arith.constant 0 : index
    %c0_81 = arith.constant 0 : index
    %93 = vector.load %arg1[%c1_79, %c0_80, %c0_81] : memref<2x4x256xf32, #tpu.memory_space<vmem>>, vector<1x1x256xf32>
    %94 = vector.shape_cast %93 : vector<1x1x256xf32> to vector<256xf32>
    %c1_82 = arith.constant 1 : index
    %c0_83 = arith.constant 0 : index
    %c0_84 = arith.constant 0 : index
    %95 = vector.load %arg2[%c1_82, %c0_83, %c0_84] : memref<2x4x256xf32, #tpu.memory_space<vmem>>, vector<1x1x256xf32>
    %96 = vector.shape_cast %95 : vector<1x1x256xf32> to vector<256xf32>
    %97 = arith.mulf %94, %96 : vector<256xf32>
    %c1_85 = arith.constant 1 : index
    %c1_86 = arith.constant 1 : index
    %c0_87 = arith.constant 0 : index
    %98 = vector.load %arg1[%c1_85, %c1_86, %c0_87] : memref<2x4x256xf32, #tpu.memory_space<vmem>>, vector<1x1x256xf32>
    %99 = vector.shape_cast %98 : vector<1x1x256xf32> to vector<256xf32>
    %c1_88 = arith.constant 1 : index
    %c1_89 = arith.constant 1 : index
    %c0_90 = arith.constant 0 : index
    %100 = vector.load %arg2[%c1_88, %c1_89, %c0_90] : memref<2x4x256xf32, #tpu.memory_space<vmem>>, vector<1x1x256xf32>
    %101 = vector.shape_cast %100 : vector<1x1x256xf32> to vector<256xf32>
    %102 = arith.mulf %99, %101 : vector<256xf32>
    %103 = arith.addf %97, %102 : vector<256xf32>
    %c1_91 = arith.constant 1 : index
    %c2_92 = arith.constant 2 : index
    %c0_93 = arith.constant 0 : index
    %104 = vector.load %arg1[%c1_91, %c2_92, %c0_93] : memref<2x4x256xf32, #tpu.memory_space<vmem>>, vector<1x1x256xf32>
    %105 = vector.shape_cast %104 : vector<1x1x256xf32> to vector<256xf32>
    %c1_94 = arith.constant 1 : index
    %c2_95 = arith.constant 2 : index
    %c0_96 = arith.constant 0 : index
    %106 = vector.load %arg2[%c1_94, %c2_95, %c0_96] : memref<2x4x256xf32, #tpu.memory_space<vmem>>, vector<1x1x256xf32>
    %107 = vector.shape_cast %106 : vector<1x1x256xf32> to vector<256xf32>
    %108 = arith.mulf %105, %107 : vector<256xf32>
    %109 = arith.addf %103, %108 : vector<256xf32>
    %c1_97 = arith.constant 1 : index
    %c3_98 = arith.constant 3 : index
    %c0_99 = arith.constant 0 : index
    %110 = vector.load %arg1[%c1_97, %c3_98, %c0_99] : memref<2x4x256xf32, #tpu.memory_space<vmem>>, vector<1x1x256xf32>
    %111 = vector.shape_cast %110 : vector<1x1x256xf32> to vector<256xf32>
    %c1_100 = arith.constant 1 : index
    %c3_101 = arith.constant 3 : index
    %c0_102 = arith.constant 0 : index
    %112 = vector.load %arg2[%c1_100, %c3_101, %c0_102] : memref<2x4x256xf32, #tpu.memory_space<vmem>>, vector<1x1x256xf32>
    %113 = vector.shape_cast %112 : vector<1x1x256xf32> to vector<256xf32>
    %114 = arith.mulf %111, %113 : vector<256xf32>
    %115 = arith.addf %109, %114 : vector<256xf32>
    %116 = arith.negf %115 : vector<256xf32>
    %117 = math.exp %116 : vector<256xf32>
    %cst_103 = arith.constant 1.000000e+00 : f32
    %118 = vector.broadcast %cst_103 : f32 to vector<256xf32>
    %119 = arith.addf %118, %117 : vector<256xf32>
    %120 = arith.divf %118, %119 : vector<256xf32>
    %c1_104 = arith.constant 1 : index
    %c1_105 = arith.constant 1 : index
    %c0_106 = arith.constant 0 : index
    %121 = vector.load %arg3[%c1_104, %c1_105, %c0_106] : memref<2x2x256xf32, #tpu.memory_space<vmem>>, vector<1x1x256xf32>
    %122 = vector.shape_cast %121 : vector<1x1x256xf32> to vector<256xf32>
    %123 = vector.shape_cast %120 : vector<256xf32> to vector<1x1x256xf32>
    tpu.vector_store %arg3[%c1_104, %c1_105, %c0_106], %123 {strides = array<i32>} : memref<2x2x256xf32, #tpu.memory_space<vmem>>, vector<1x1x256xf32>,
    return
  }
  func.func @transform_0(%arg0: i32) -> (i32, i32, i32) {
    %c0_i32 = arith.constant 0 : i32
    %c0_i32_0 = arith.constant 0 : i32
    %c0_i32_1 = arith.constant 0 : i32
    return %c0_i32, %c0_i32_0, %arg0 : i32, i32, i32
  }
  func.func @transform_1(%arg0: i32) -> (i32, i32, i32) {
    %c0_i32 = arith.constant 0 : i32
    %c0_i32_0 = arith.constant 0 : i32
    %c0_i32_1 = arith.constant 0 : i32
    return %c0_i32, %c0_i32_0, %arg0 : i32, i32, i32
  }
  func.func @transform_2(%arg0: i32) -> (i32, i32, i32) {
    %c0_i32 = arith.constant 0 : i32
    %c0_i32_0 = arith.constant 0 : i32
    %c0_i32_1 = arith.constant 0 : i32
    return %c0_i32, %c0_i32_0, %arg0 : i32, i32, i32
  }
}

</mosaic_0001>

<llo_original>
// kernel: tpu_custom_call.1
$region0: #{tpu_custom_call.1}
  #allocation0 [shape = 'u32[]', space=smem, size = 0x4, offset = 0x4, fixed_abs, tag = 'smem constant byte address 0x4 - core index']
  #allocation1 [shape = 'u32[144,128]{1,0:T(1,128)}', space=vmem, size = 0x12000, scoped, tag = 'internal scratch']
  %s0 = inlined_call_operand.hbm [shape: f32[2,4,256], index: 0, kind: input, shape index: {}]
  %s1 = inlined_call_operand.hbm [shape: f32[2,4,256], index: 1, kind: input, shape index: {}]
  %s2 = inlined_call_operand.hbm [shape: f32[2,2,256], index: 2, kind: output, shape index: {}]
  %s3 = sld [smem:[#allocation0]]
  $region26: #{tpu_custom_call.1} parent=0
    _
  %s5 = ssub.s32 1, %s3
  %s6 = scalar_select 0, %s5, %s3
  $region1: #{tpu_custom_call.1} parent=0
    #allocation2 [shape = 'u8[8192]{0}', space=vmem, size = 0x2000, scoped, tag = 'input window, operand 0, single buffered']
    #allocation3 [shape = 's32[1]{0}', space=sflag, size = 0x4, scoped, tag = 'scoped memory for tpu_custom_call.1']
    #allocation4 [shape = 's32[1]{0}', space=sflag, size = 0x4, scoped, tag = 'scoped memory for tpu_custom_call.1']
    #allocation5 [shape = 'u8[8192]{0}', space=vmem, size = 0x2000, scoped, tag = 'input window, operand 1, single buffered']
    #allocation6 [shape = 's32[1]{0}', space=sflag, size = 0x4, scoped, tag = 'scoped memory for tpu_custom_call.1']
    #allocation7 [shape = 'u8[4096]{0}', space=vmem, size = 0x1000, scoped, tag = 'output window, operand 0, single buffered']
    %7 = vsyncpa [#allocation3], 0
    %8 = vsyncpa [#allocation6], 0
    %9 = vsyncpa [#allocation4], 0
    // Predicated region
    $region2: #{tpu_custom_call.1} parent=1 // pred_check
      _
    $region3: #{tpu_custom_call.1} parent=1 // pred_check_branch
      %11 = sbr.rel (0) target = $region5
    $region4: #{tpu_custom_call.1} parent=1 // pred_region
      %s13 = ssub.s32 256, 256
      %14 = vsyncadd [#allocation3], %s13
      %s15 = sshll.u32 [#allocation2], 4
      %s16 = int_to_ptr.vmem [resolvable:$true] %s15
      %21 = dma.hbm_to_vmem [thread:$0]  %s0, 256, %s16, [#allocation3], 128, 128, 8
    $region5: #{tpu_custom_call.1} parent=1 // pred_fallthru
      _
    // Predicated region
    $region6: #{tpu_custom_call.1} parent=1 // pred_check
      _
    $region7: #{tpu_custom_call.1} parent=1 // pred_check_branch
      %23 = sbr.rel (0) target = $region9
    $region8: #{tpu_custom_call.1} parent=1 // pred_region
      %s25 = ssub.s32 256, 256
      %26 = vsyncadd [#allocation6], %s25
      %s27 = sshll.u32 [#allocation5], 4
      %s28 = int_to_ptr.vmem [resolvable:$true] %s27
      %33 = dma.hbm_to_vmem [thread:$0]  %s1, 256, %s28, [#allocation6], 128, 128, 8
    $region9: #{tpu_custom_call.1} parent=1 // pred_fallthru
      _
    // Predicated region
    $region10: #{tpu_custom_call.1} parent=1 // pred_check
      _
    $region11: #{tpu_custom_call.1} parent=1 // pred_check_branch
      %35 = sbr.rel (0) target = $region13
    $region12: #{tpu_custom_call.1} parent=1 // pred_region
      %36 = dma.done [#allocation3], 256
    $region13: #{tpu_custom_call.1} parent=1 // pred_fallthru
      _
    // Predicated region
    $region14: #{tpu_custom_call.1} parent=1 // pred_check
      _
    $region15: #{tpu_custom_call.1} parent=1 // pred_check_branch
      %38 = sbr.rel (0) target = $region17
    $region16: #{tpu_custom_call.1} parent=1 // pred_region
      %39 = dma.done [#allocation6], 256
    $region17: #{tpu_custom_call.1} parent=1 // pred_fallthru
      _
    %v40 = vld [vmem:[#allocation2] ss:$4 sm:$0x3]
    %v41 = vld [vmem:[#allocation5] ss:$4 sm:$0x3]
    %v42 = vmul.f32 %v40, %v41
    %s43 = scalar_lea.vmem [#allocation2], 1
    %v44 = vld [vmem:[%s43] ss:$4 sm:$0x3]
    %s45 = scalar_lea.vmem [#allocation5], 1
    %v46 = vld [vmem:[%s45] ss:$4 sm:$0x3]
    %v47 = vmul.f32 %v44, %v46
    %v48 = vadd.f32 %v42, %v47
    %s49 = scalar_lea.vmem [#allocation2], 2
    %v50 = vld [vmem:[%s49] ss:$4 sm:$0x3]
    %s51 = scalar_lea.vmem [#allocation5], 2
    %v52 = vld [vmem:[%s51] ss:$4 sm:$0x3]
    %v53 = vmul.f32 %v50, %v52
    %v54 = vadd.f32 %v48, %v53
    %s55 = scalar_lea.vmem [#allocation2], 3
    %v56 = vld [vmem:[%s55] ss:$4 sm:$0x3]
    %s57 = scalar_lea.vmem [#allocation5], 3
    %v58 = vld [vmem:[%s57] ss:$4 sm:$0x3]
    %v59 = vmul.f32 %v56, %v58
    %v60 = vadd.f32 %v54, %v59
    %v61 = vxor.u32 %v60, 2147483648
    %v62 = vmul.f32 %v61, 1.442695
    %v63 = vpow.pop %v62
    %v64 = vadd.f32 %v63, 1.0
    %v65 = vrcp.pop %v64
    %v66 = vmul.f32 1.0, %v65
    %v67 = vlaneseq
    %vm68 = vcmp.ge.s32.totalorder %v67, 0
    %vm69 = vcmp.lt.s32.totalorder %v67, 256
    %vm70 = vmand %vm68, %vm69
    %71 = vst.msk [vmem:[#allocation7] ss:$2 sm:$0x3] %vm70, %v66
    %v72 = vld [vmem:[#allocation2] ss:$4 sm:$0x3]
    %s73 = scalar_lea.vmem [#allocation5], 8
    %v74 = vld [vmem:[%s73] ss:$4 sm:$0x3]
    %v75 = vmul.f32 %v72, %v74
    %v76 = vld [vmem:[%s43] ss:$4 sm:$0x3]
    %s77 = scalar_lea.vmem %s73, 1 [#allocation5]
    %v78 = vld [vmem:[%s77] ss:$4 sm:$0x3]
    %v79 = vmul.f32 %v76, %v78
    %v80 = vadd.f32 %v75, %v79
    %v81 = vld [vmem:[%s49] ss:$4 sm:$0x3]
    %s82 = scalar_lea.vmem %s73, 2 [#allocation5]
    %v83 = vld [vmem:[%s82] ss:$4 sm:$0x3]
    %v84 = vmul.f32 %v81, %v83
    %v85 = vadd.f32 %v80, %v84
    %v86 = vld [vmem:[%s55] ss:$4 sm:$0x3]
    %s87 = scalar_lea.vmem %s73, 3 [#allocation5]
    %v88 = vld [vmem:[%s87] ss:$4 sm:$0x3]
    %v89 = vmul.f32 %v86, %v88
    %v90 = vadd.f32 %v85, %v89
    %v91 = vxor.u32 %v90, 2147483648
    %v92 = vmul.f32 %v91, 1.442695
    %v93 = vpow.pop %v92
    %v94 = vadd.f32 %v93, 1.0
    %v95 = vrcp.pop %v94
    %v96 = vmul.f32 1.0, %v95
    %s97 = scalar_lea.vmem [#allocation7], 1
    %98 = vst.msk [vmem:[%s97] ss:$2 sm:$0x3] %vm70, %v96
    %s99 = scalar_lea.vmem [#allocation2], 8
    %v100 = vld [vmem:[%s99] ss:$4 sm:$0x3]
    %v101 = vld [vmem:[#allocation5] ss:$4 sm:$0x3]
    %v102 = vmul.f32 %v100, %v101
    %s103 = scalar_lea.vmem %s99, 1 [#allocation2]
    %v104 = vld [vmem:[%s103] ss:$4 sm:$0x3]
    %v105 = vld [vmem:[%s45] ss:$4 sm:$0x3]
    %v106 = vmul.f32 %v104, %v105
    %v107 = vadd.f32 %v102, %v106
    %s108 = scalar_lea.vmem %s99, 2 [#allocation2]
    %v109 = vld [vmem:[%s108] ss:$4 sm:$0x3]
    %v110 = vld [vmem:[%s51] ss:$4 sm:$0x3]
    %v111 = vmul.f32 %v109, %v110
    %v112 = vadd.f32 %v107, %v111
    %s113 = scalar_lea.vmem %s99, 3 [#allocation2]
    %v114 = vld [vmem:[%s113] ss:$4 sm:$0x3]
    %v115 = vld [vmem:[%s57] ss:$4 sm:$0x3]
    %v116 = vmul.f32 %v114, %v115
    %v117 = vadd.f32 %v112, %v116
    %v118 = vxor.u32 %v117, 2147483648
    %v119 = vmul.f32 %v118, 1.442695
    %v120 = vpow.pop %v119
    %v121 = vadd.f32 %v120, 1.0
    %v122 = vrcp.pop %v121
    %v123 = vmul.f32 1.0, %v122
    %s124 = scalar_lea.vmem [#allocation7], 4
    %125 = vst.msk [vmem:[%s124] ss:$2 sm:$0x3] %vm70, %v123
    %v126 = vld [vmem:[%s99] ss:$4 sm:$0x3]
    %v127 = vld [vmem:[%s73] ss:$4 sm:$0x3]
    %v128 = vmul.f32 %v126, %v127
    %v129 = vld [vmem:[%s103] ss:$4 sm:$0x3]
    %v130 = vld [vmem:[%s77] ss:$4 sm:$0x3]
    %v131 = vmul.f32 %v129, %v130
    %v132 = vadd.f32 %v128, %v131
    %v133 = vld [vmem:[%s108] ss:$4 sm:$0x3]
    %v134 = vld [vmem:[%s82] ss:$4 sm:$0x3]
    %v135 = vmul.f32 %v133, %v134
    %v136 = vadd.f32 %v132, %v135
    %v137 = vld [vmem:[%s113] ss:$4 sm:$0x3]
    %v138 = vld [vmem:[%s87] ss:$4 sm:$0x3]
    %v139 = vmul.f32 %v137, %v138
    %v140 = vadd.f32 %v136, %v139
    %v141 = vxor.u32 %v140, 2147483648
    %v142 = vmul.f32 %v141, 1.442695
    %v143 = vpow.pop %v142
    %v144 = vadd.f32 %v143, 1.0
    %v145 = vrcp.pop %v144
    %v146 = vmul.f32 1.0, %v145
    %s147 = scalar_lea.vmem %s124, 1 [#allocation7]
    %148 = vst.msk [vmem:[%s147] ss:$2 sm:$0x3] %vm70, %v146
    // Predicated region
    $region18: #{tpu_custom_call.1} parent=1 // pred_check
      _
    $region19: #{tpu_custom_call.1} parent=1 // pred_check_branch
      %150 = sbr.rel (0) target = $region21
    $region20: #{tpu_custom_call.1} parent=1 // pred_region
      %s152 = ssub.s32 128, 128
      %153 = vsyncadd [#allocation4], %s152
      %s154 = sshll.u32 [#allocation7], 4
      %s155 = int_to_ptr.vmem [resolvable:$true] %s154
      %160 = dma.vmem_to_hbm [thread:$0]  %s155, 128, %s2, [#allocation4], 64, 64, 4
    $region21: #{tpu_custom_call.1} parent=1 // pred_fallthru
      _
    // Predicated region
    $region22: #{tpu_custom_call.1} parent=1 // pred_check
      _
    $region23: #{tpu_custom_call.1} parent=1 // pred_check_branch
      %162 = sbr.rel (0) target = $region25
    $region24: #{tpu_custom_call.1} parent=1 // pred_region
      %163 = dma.done [#allocation4], 128
    $region25: #{tpu_custom_call.1} parent=1 // pred_fallthru
      _
    %164 = vsyncpa [#allocation3], 1
    %165 = vsyncpa [#allocation6], 1
    %166 = vsyncpa [#allocation4], 1

</llo_original>
